<compile_context>
chip_gen: v5e
topology: v5e:2x2
jax: 0.10.0
libtpu: 0.0.40
codegen_flags: <defaults>
</compile_context>

<pallas_src>
import jax
import jax.numpy as jnp
from jax.experimental import pallas as pl
from jax.experimental.pallas import tpu as pltpu

_BYPASS_BYTES = 1 << 20   # identity is free: below ~1 MiB just return x
_CHUNK_BYTES = 4 << 20    # above ~4 MiB, keep several DMAs in flight
_MAX_CHUNKS = 4


def _chunk_bounds(dim0: int, nbytes: int):
    """Static (start, size) chunks along the leading dim for concurrent DMAs."""
    if dim0 <= 1 or nbytes < _CHUNK_BYTES:
        return ((0, dim0),)
    n = min(_MAX_CHUNKS, dim0)
    base, rem = divmod(dim0, n)
    bounds, start = [], 0
    for c in range(n):
        size = base + (1 if c < rem else 0)
        bounds.append((start, size))
        start += size
    return tuple(bounds)


def _make_hbm_copy_kernel(chunk_bounds):
    """HBM -> HBM DMA copy: no VMEM staging, no (8,128) layout constraints."""

    def kernel(x_hbm, o_hbm, sems):
        copies = []
        for c, (start, size) in enumerate(chunk_bounds):
            cp = pltpu.make_async_copy(
                x_hbm.at[pl.ds(start, size)],
                o_hbm.at[pl.ds(start, size)],
                sems.at[c],
            )
            cp.start()
            copies.append(cp)
        # All descriptors are in flight before the first wait -> the copy is
        # limited only by HBM bandwidth on v5e / v6e / v7x alike.
        for cp in copies:
            cp.wait()

    return kernel


def identity_first_stage_forward(x: jax.Array, *, force_kernel: bool = False) -> jax.Array:
    """Pallas equivalent of IdentityFirstStage.forward(x) -> x.

    Default path returns x directly (zero HBM traffic).  The HBM->HBM DMA copy
    kernel runs only when forced (validation) or for tensors large enough that a
    pipelined copy is meaningful.
    """
    if x.ndim == 0 or x.size == 0:
        return x

    nbytes = x.size * x.dtype.itemsize
    if not force_kernel and nbytes < _BYPASS_BYTES:
        return x

    bounds = _chunk_bounds(x.shape[0], nbytes)
    kernel = _make_hbm_copy_kernel(bounds)

    return pl.pallas_call(
        kernel,
        out_shape=jax.ShapeDtypeStruct(x.shape, x.dtype),
        in_specs=[pl.BlockSpec(memory_space=pl.ANY)],
        out_specs=pl.BlockSpec(memory_space=pl.ANY),
        scratch_shapes=[pltpu.SemaphoreType.DMA((len(bounds),))],
        cost_estimate=pl.CostEstimate(
            flops=0, transcendentals=0, bytes_accessed=2 * nbytes
        ),
    )(x)


class IdentityFirstStage:
    """JAX/Pallas port of imaginairy's IdentityFirstStage (no parameters)."""

    def __init__(self, *args, vq_interface: bool = False, **kwargs):
        self.vq_interface = vq_interface

    def encode(self, x, *args, **kwargs):
        return identity_first_stage_forward(x)

    def decode(self, x, *args, **kwargs):
        return identity_first_stage_forward(x)

    def quantize(self, x, *args, **kwargs):
        y = identity_first_stage_forward(x)
        if self.vq_interface:
            return (y, None, [None, None, None])
        return y

    def forward(self, x, *args, **kwargs):
        return identity_first_stage_forward(x)

    __call__ = forward


if __name__ == "__main__":
    key = jax.random.PRNGKey(0)
    k1, k2, k3 = jax.random.split(key, 3)

    model = IdentityFirstStage()

    # 1) Spec-sized NCHW input: default path returns x directly (optimal identity).
    x = jax.random.normal(k1, (2, 4, 16, 16), dtype=jnp.float32)
    y = jax.block_until_ready(model(x))
    assert y.shape == x.shape and y.dtype == x.dtype
    assert bool(jnp.array_equal(y, x))

    # 2) Force the HBM->HBM DMA kernel on the same spec shape.
    y_k = jax.block_until_ready(identity_first_stage_forward(x, force_kernel=True))
    assert y_k.shape == x.shape and y_k.dtype == x.dtype
    assert bool(jnp.array_equal(y_k, x))

    # 3) Odd, non-lane-dense shape forced through the kernel (previously such
    #    shapes were silently bypassed; the DMA path handles them directly).
    x_odd = jax.random.normal(k2, (3, 7, 11), dtype=jnp.float32)
    y_odd = jax.block_until_ready(identity_first_stage_forward(x_odd, force_kernel=True))
    assert y_odd.shape == x_odd.shape and y_odd.dtype == x_odd.dtype
    assert bool(jnp.array_equal(y_odd, x_odd))

    # 4) Larger tensor (4 MiB): routed through the kernel, split into 4 concurrent
    #    DMAs along the leading dim.
    x_big = jax.random.normal(k3, (4, 4, 256, 256), dtype=jnp.float32)
    y_big = jax.block_until_ready(model(x_big))
    assert y_big.shape == x_big.shape and y_big.dtype == x_big.dtype
    assert bool(jnp.array_equal(y_big, x_big))

    # 5) vq_interface tuple behaviour matches the PyTorch module.
    vq_model = IdentityFirstStage(vq_interface=True)
    q, _, extras = vq_model.quantize(x)
    assert bool(jnp.array_equal(q, x)) and extras == [None, None, None]

    print("KERNEL_OK")
</pallas_src>

<mosaic_0001>
module attributes {stable_mosaic.version = 11 : i64} {
  func.func @kernel(%arg0: memref<2x4x16x16xf32, #tpu.memory_space<any>>, %arg1: memref<2x4x16x16xf32, #tpu.memory_space<any>>, %arg2: memref<1x!tpu.dma_semaphore, #tpu.memory_space<semaphore_mem>>) attributes {dimension_semantics = [], scalar_prefetch = 0 : i64, scratch_operands = 1 : i64, tpu.core_type = #tpu.core_type<tc>} {
    %c0_i32 = arith.constant 0 : i32
    %c0_i32_0 = arith.constant 0 : i32
    %c0_i32_1 = arith.constant 0 : i32
    %c0_i32_2 = arith.constant 0 : i32
    %c0_i32_3 = arith.constant 0 : i32
    %0 = tpu.memref_slice %arg0[%c0_i32_0, %c0_i32_1, %c0_i32_2, %c0_i32_3] : memref<2x4x16x16xf32, #tpu.memory_space<any>> -> memref<2x4x16x16xf32, #tpu.memory_space<any>>
    %c0_i32_4 = arith.constant 0 : i32
    %c0_i32_5 = arith.constant 0 : i32
    %c0_i32_6 = arith.constant 0 : i32
    %c0_i32_7 = arith.constant 0 : i32
    %1 = tpu.memref_slice %arg1[%c0_i32_4, %c0_i32_5, %c0_i32_6, %c0_i32_7] : memref<2x4x16x16xf32, #tpu.memory_space<any>> -> memref<2x4x16x16xf32, #tpu.memory_space<any>>
    %2 = tpu.memref_slice %arg2[%c0_i32] : memref<1x!tpu.dma_semaphore, #tpu.memory_space<semaphore_mem>> -> memref<1x!tpu.dma_semaphore, #tpu.memory_space<semaphore_mem>>
    %3 = tpu.memref_squeeze %2 : memref<1x!tpu.dma_semaphore, #tpu.memory_space<semaphore_mem>> -> memref<!tpu.dma_semaphore, #tpu.memory_space<semaphore_mem>>
    tpu.enqueue_dma source(%0 : memref<2x4x16x16xf32, #tpu.memory_space<any>>) target(%1 : memref<2x4x16x16xf32, #tpu.memory_space<any>>) target_semaphore(%3 : memref<!tpu.dma_semaphore, #tpu.memory_space<semaphore_mem>>)
    %c0_i32_8 = arith.constant 0 : i32
    %c0_i32_9 = arith.constant 0 : i32
    %c0_i32_10 = arith.constant 0 : i32
    %c0_i32_11 = arith.constant 0 : i32
    %c0_i32_12 = arith.constant 0 : i32
    %4 = tpu.memref_slice %arg0[%c0_i32_9, %c0_i32_10, %c0_i32_11, %c0_i32_12] : memref<2x4x16x16xf32, #tpu.memory_space<any>> -> memref<2x4x16x16xf32, #tpu.memory_space<any>>
    %c0_i32_13 = arith.constant 0 : i32
    %c0_i32_14 = arith.constant 0 : i32
    %c0_i32_15 = arith.constant 0 : i32
    %c0_i32_16 = arith.constant 0 : i32
    %5 = tpu.memref_slice %arg1[%c0_i32_13, %c0_i32_14, %c0_i32_15, %c0_i32_16] : memref<2x4x16x16xf32, #tpu.memory_space<any>> -> memref<2x4x16x16xf32, #tpu.memory_space<any>>
    %6 = tpu.memref_slice %arg2[%c0_i32_8] : memref<1x!tpu.dma_semaphore, #tpu.memory_space<semaphore_mem>> -> memref<1x!tpu.dma_semaphore, #tpu.memory_space<semaphore_mem>>
    %7 = tpu.memref_squeeze %6 : memref<1x!tpu.dma_semaphore, #tpu.memory_space<semaphore_mem>> -> memref<!tpu.dma_semaphore, #tpu.memory_space<semaphore_mem>>
    tpu.wait_dma2 semaphore(%7 : memref<!tpu.dma_semaphore, #tpu.memory_space<semaphore_mem>>) src(%4 : memref<2x4x16x16xf32, #tpu.memory_space<any>>) dst(%5 : memref<2x4x16x16xf32, #tpu.memory_space<any>>)
    return
  }
}

</mosaic_0001>

<llo_original>
// kernel: tpu_custom_call.1
$region0: #{tpu_custom_call.1}
  #allocation0 [shape = 'u32[]', space=smem, size = 0x4, offset = 0x4, fixed_abs, tag = 'smem constant byte address 0x4 - core index']
  #allocation1 [shape = 'u32[72,128]{1,0:T(1,128)}', space=vmem, size = 0x9000, scoped, tag = 'internal scratch']
  #allocation2 [shape = 's32[1]{0}', space=sflag, size = 0x4, scoped, tag = 'scratch operand']
  #allocation3 [shape = 's32[]', space=sflag, size = 0x4, offset = 0, fixed_abs, tag = 'sflag constant byte address 0x0 - dummy sync flag']
  #allocation4 [shape = 'u32[0]{0}', space=smem, size = 0, offset = 0, fixed_abs, tag = 'smem constant byte address 0x0 - null']
  %s0 = inlined_call_operand.hbm [shape: f32[2,4,16,16], index: 0, kind: input, shape index: {}]
  %s1 = inlined_call_operand.hbm [shape: f32[2,4,16,16], index: 1, kind: output, shape index: {}]
  %s2 = sld [smem:[#allocation0]]
  $region2: #{tpu_custom_call.1} parent=0
    _
  %s4 = ssub.s32 1, %s2
  %s5 = scalar_select 0, %s4, %s2
  %s7 = sshll.u32 1, 14
  %s8 = sxor.u32 4294967295, %s7
  %s10 = sshll.u32 %s0, 4
  %s11 = int_to_ptr.hbm [resolvable:$true] %s10
  %s12 = sshll.u32 %s1, 4
  %s13 = int_to_ptr.hbm [resolvable:$true] %s12
  %16 = dma.general %s11, 2048, %s13, [#allocation2], [#allocation3], [#allocation4], 0, 0
  %s17 = smul.u32 2, 4
  %s18 = smul.u32 %s17, 16
  %s19 = smul.u32 %s18, 1
  %s20 = sshll.u32 %s19, 4
  %21 = dma.done [#allocation2], %s20
  %22 = vsyncmov [#allocation2]
  %s23 = vpop.sfrf %22
  %p24 = scmp.eq.s32.totalorder %s23, 0
  %p25 = pneg %p24
  %27 = shalt.err (%p25)

</llo_original>
